<compile_context>
chip_gen: v7x
topology: tpu7x:2x2x1
jax: 0.10.0
libtpu: 0.0.40
codegen_flags: <defaults>
</compile_context>

<pallas_src>
import jax
import jax.numpy as jnp
from jax import lax
from jax.experimental import pallas as pl
from jax.experimental.pallas import tpu as pltpu

_LANE = 128


def _round_up(n, m):
    return ((n + m - 1) // m) * m


def modal_classifier_kernel(x_ref, vec_ref, w_ref, o_ref):
    """o = relu(relu(BN(x) @ W1 + b1) @ W2 + b2) @ W3 + b3 (single invocation).

    x_ref:   (B, 128)      f32   input, zero-padded lanes
    vec_ref: (8, 128)      f32   rows: [gamma, beta, b1, b2, b3, 0, 0, 0]
    w_ref:   (3, 128, 128)  bf16  stacked pre-transposed, pre-padded weights
    o_ref:   (B, 128)      f32   padded output (valid cols = num classes)
    """
    x = x_ref[...]                                            # (B, 128) f32
    vecs = vec_ref[...]                                       # (8, 128) f32
    gamma = vecs[0:1, :]
    beta = vecs[1:2, :]
    b1 = vecs[2:3, :]
    b2 = vecs[3:4, :]
    b3 = vecs[4:5, :]

    # ---- BatchNorm1d, training mode: batch statistics, biased variance ----
    # Two-pass, f32 stats (v5e has no bf16 VPU/EUP path; avoids cancellation).
    mean = jnp.mean(x, axis=0, keepdims=True)                 # (1, 128)
    xc = x - mean
    var = jnp.mean(xc * xc, axis=0, keepdims=True)            # biased variance
    scale = gamma * lax.rsqrt(var + 1e-5)                     # (1, 128)
    shift = beta - mean * scale                               # (1, 128)

    # Normalize in f32, cast the small (B,128) activation once for the MXU.
    xs = (x * scale + shift).astype(jnp.bfloat16)

    # ---- denseL1 + ReLU (bf16 MXU operands, f32 accumulation) ----
    h1 = jnp.dot(xs, w_ref[0], preferred_element_type=jnp.float32) + b1
    h1 = jnp.maximum(h1, 0.0)

    # ---- denseL2 + ReLU ----
    h2 = jnp.dot(h1.astype(jnp.bfloat16), w_ref[1],
                 preferred_element_type=jnp.float32) + b2
    h2 = jnp.maximum(h2, 0.0)

    # ---- denseL3 (no activation) ----
    out = jnp.dot(h2.astype(jnp.bfloat16), w_ref[2],
                  preferred_element_type=jnp.float32) + b3
    o_ref[...] = out.astype(o_ref.dtype)


def prepare_params(gamma, beta, w1_t, b1, w2_t, b2, w3_t, b3):
    """One-time parameter prep: zero-pad to 128 lanes, coalesce, cast weights
    to bf16.  Call once; reuse the result for every forward."""
    D = w1_t.shape[0]
    H1 = w1_t.shape[1]
    H2 = w2_t.shape[1]
    C = w3_t.shape[1]
    Dp, H1p, H2p, Cp = (_round_up(d, _LANE) for d in (D, H1, H2, C))
    assert Dp == H1p == H2p == Cp == _LANE, "dims must pad to a single lane tile"

    def pad2(a, rows, cols):
        return jnp.pad(a, ((0, rows - a.shape[0]), (0, cols - a.shape[1])))

    # Zero-padding keeps the math exact: padded gamma/beta/weights/biases are 0,
    # so padded lanes of every intermediate are exactly 0.
    vec_stack = jnp.stack([
        pad2(gamma, 1, _LANE)[0],
        pad2(beta, 1, _LANE)[0],
        pad2(b1, 1, _LANE)[0],
        pad2(b2, 1, _LANE)[0],
        pad2(b3, 1, _LANE)[0],
        jnp.zeros((_LANE,), jnp.float32),
        jnp.zeros((_LANE,), jnp.float32),
        jnp.zeros((_LANE,), jnp.float32),
    ]).astype(jnp.float32)                                    # (8, 128) f32

    w_stack = jnp.stack([
        pad2(w1_t, _LANE, _LANE),
        pad2(w2_t, _LANE, _LANE),
        pad2(w3_t, _LANE, _LANE),
    ]).astype(jnp.bfloat16)                                   # (3, 128, 128) bf16

    return jax.device_put(vec_stack), jax.device_put(w_stack)


@jax.jit
def modal_classifier_forward(x, vec_stack, w_stack):
    """x: (B, D) f32.  Returns padded (B, 128) logits; valid columns are
    [0, num_classes) — slice lazily downstream."""
    B, D = x.shape
    xp = jnp.pad(x, ((0, 0), (0, _LANE - D)))                 # only x pads per call

    flops = 2 * B * _LANE * _LANE * 3
    bytes_accessed = (B * _LANE * 4) * 2 + 8 * _LANE * 4 + 3 * _LANE * _LANE * 2

    out = pl.pallas_call(
        modal_classifier_kernel,
        out_shape=jax.ShapeDtypeStruct((B, _LANE), jnp.float32),
        in_specs=[pl.BlockSpec(memory_space=pltpu.MemorySpace.VMEM)
                  for _ in range(3)],
        out_specs=pl.BlockSpec(memory_space=pltpu.MemorySpace.VMEM),
        cost_estimate=pl.CostEstimate(flops=flops, transcendentals=_LANE,
                                      bytes_accessed=bytes_accessed),
    )(xp, vec_stack, w_stack)
    return out


if __name__ == "__main__":
    # Shapes implied by the module defaults: input_dim=40 -> 10 -> 2 -> 2.
    B, D = 8, 40
    H1, H2, C = D // 4, D // 16, 2

    key = jax.random.PRNGKey(0)
    kx, kg, kb, kw1, kb1, kw2, kb2, kw3, kb3 = jax.random.split(key, 9)

    x = jax.random.normal(kx, (B, D), dtype=jnp.float32)

    # BatchNorm affine params (PyTorch init: weight=1, bias=0; perturb slightly).
    gamma = 1.0 + 0.1 * jax.random.normal(kg, (1, D), dtype=jnp.float32)
    beta = 0.1 * jax.random.normal(kb, (1, D), dtype=jnp.float32)

    def linear_init(kw_, kb_, fan_in, fan_out):
        bound = 1.0 / (fan_in ** 0.5)
        w_t = jax.random.uniform(kw_, (fan_in, fan_out), jnp.float32, -bound, bound)
        b = jax.random.uniform(kb_, (1, fan_out), jnp.float32, -bound, bound)
        return w_t, b

    w1_t, b1 = linear_init(kw1, kb1, D, H1)
    w2_t, b2 = linear_init(kw2, kb2, H1, H2)
    w3_t, b3 = linear_init(kw3, kb3, H2, C)

    # One-time parameter prep (padding / coalescing / bf16 cast hoisted here).
    vec_stack, w_stack = prepare_params(gamma, beta, w1_t, b1, w2_t, b2, w3_t, b3)

    out_padded = modal_classifier_forward(x, vec_stack, w_stack)
    jax.block_until_ready(out_padded)
    out = out_padded[:, :C]                                   # lazy consumer slice

    # Pure-JAX f32 reference of the module's forward (ReverseLayerF == identity).
    mean = jnp.mean(x, axis=0, keepdims=True)
    var = jnp.mean((x - mean) ** 2, axis=0, keepdims=True)    # biased variance
    y = (x - mean) / jnp.sqrt(var + 1e-5) * gamma + beta
    h1 = jnp.maximum(y @ w1_t + b1, 0.0)
    h2 = jnp.maximum(h1 @ w2_t + b2, 0.0)
    ref = h2 @ w3_t + b3

    assert out.shape == (B, C)
    # Tolerance accommodates bf16 MXU operands (f32 accumulation).
    assert jnp.allclose(out, ref, atol=2e-2, rtol=2e-2), (
        float(jnp.max(jnp.abs(out - ref))))
    # Padded lanes must be exactly zero (zero-padded params guarantee it).
    assert jnp.all(out_padded[:, C:] == 0.0)

    # TODO(synk): BatchNorm1d running_mean/running_var bookkeeping (a training
    # side effect) is not modeled; forward output does not depend on it.
    print("KERNEL_OK")
</pallas_src>

<mosaic_0001>
module attributes {stable_mosaic.version = 11 : i64} {
  func.func @modal_classifier_kernel(%arg0: memref<8x128xf32, #tpu.memory_space<vmem>>, %arg1: memref<8x128xf32, #tpu.memory_space<vmem>>, %arg2: memref<3x128x128xbf16, #tpu.memory_space<vmem>>, %arg3: memref<8x128xf32, #tpu.memory_space<vmem>>) attributes {dimension_semantics = [], scalar_prefetch = 0 : i64, scratch_operands = 0 : i64, tpu.core_type = #tpu.core_type<tc>} {
    %c0 = arith.constant 0 : index
    %c0_0 = arith.constant 0 : index
    %0 = vector.load %arg0[%c0, %c0_0] : memref<8x128xf32, #tpu.memory_space<vmem>>, vector<8x128xf32>
    %c0_1 = arith.constant 0 : index
    %c0_2 = arith.constant 0 : index
    %1 = vector.load %arg1[%c0_1, %c0_2] : memref<8x128xf32, #tpu.memory_space<vmem>>, vector<8x128xf32>
    %2 = vector.extract_strided_slice %1 {offsets = [0, 0], sizes = [1, 128], strides = [1, 1]} : vector<8x128xf32> to vector<1x128xf32>
    %3 = vector.extract_strided_slice %1 {offsets = [1, 0], sizes = [1, 128], strides = [1, 1]} : vector<8x128xf32> to vector<1x128xf32>
    %4 = vector.extract_strided_slice %1 {offsets = [2, 0], sizes = [1, 128], strides = [1, 1]} : vector<8x128xf32> to vector<1x128xf32>
    %5 = vector.extract_strided_slice %1 {offsets = [3, 0], sizes = [1, 128], strides = [1, 1]} : vector<8x128xf32> to vector<1x128xf32>
    %6 = vector.extract_strided_slice %1 {offsets = [4, 0], sizes = [1, 128], strides = [1, 1]} : vector<8x128xf32> to vector<1x128xf32>
    %cst = arith.constant dense<0.000000e+00> : vector<128xf32>
    %7 = vector.multi_reduction <add>, %0, %cst [0] : vector<8x128xf32> to vector<128xf32>
    %8 = vector.shape_cast %7 : vector<128xf32> to vector<1x128xf32>
    %cst_3 = arith.constant 8.000000e+00 : f32
    %9 = vector.broadcast %cst_3 : f32 to vector<1x128xf32>
    %10 = arith.divf %8, %9 : vector<1x128xf32>
    %11 = vector.broadcast %10 : vector<1x128xf32> to vector<8x128xf32>
    %12 = arith.subf %0, %11 : vector<8x128xf32>
    %13 = arith.mulf %12, %12 : vector<8x128xf32>
    %cst_4 = arith.constant dense<0.000000e+00> : vector<128xf32>
    %14 = vector.multi_reduction <add>, %13, %cst_4 [0] : vector<8x128xf32> to vector<128xf32>
    %15 = vector.shape_cast %14 : vector<128xf32> to vector<1x128xf32>
    %cst_5 = arith.constant 8.000000e+00 : f32
    %16 = vector.broadcast %cst_5 : f32 to vector<1x128xf32>
    %17 = arith.divf %15, %16 : vector<1x128xf32>
    %cst_6 = arith.constant 9.99999974E-6 : f32
    %18 = vector.broadcast %cst_6 : f32 to vector<1x128xf32>
    %19 = arith.addf %17, %18 : vector<1x128xf32>
    %20 = math.rsqrt %19 : vector<1x128xf32>
    %21 = arith.mulf %2, %20 : vector<1x128xf32>
    %22 = arith.mulf %10, %21 : vector<1x128xf32>
    %23 = arith.subf %3, %22 : vector<1x128xf32>
    %24 = vector.broadcast %21 : vector<1x128xf32> to vector<8x128xf32>
    %25 = arith.mulf %0, %24 : vector<8x128xf32>
    %26 = vector.broadcast %23 : vector<1x128xf32> to vector<8x128xf32>
    %27 = arith.addf %25, %26 : vector<8x128xf32>
    %28 = arith.truncf %27 : vector<8x128xf32> to vector<8x128xbf16>
    %c0_7 = arith.constant 0 : index
    %c0_8 = arith.constant 0 : index
    %c0_9 = arith.constant 0 : index
    %29 = vector.load %arg2[%c0_7, %c0_8, %c0_9] : memref<3x128x128xbf16, #tpu.memory_space<vmem>>, vector<1x128x128xbf16>
    %30 = vector.shape_cast %29 : vector<1x128x128xbf16> to vector<128x128xbf16>
    %cst_10 = arith.constant dense<0.000000e+00> : vector<8x128xf32>
    %31 = tpu.matmul %28, %30, %cst_10 {dimension_numbers = #tpu.dot_dimension_numbers<[1], [0], [0], [1], [0, 0, 1, 1], [], []>} : vector<8x128xbf16>, vector<128x128xbf16>, vector<8x128xf32> -> vector<8x128xf32>
    %32 = vector.broadcast %4 : vector<1x128xf32> to vector<8x128xf32>
    %33 = arith.addf %31, %32 : vector<8x128xf32>
    %cst_11 = arith.constant 0.000000e+00 : f32
    %34 = vector.broadcast %cst_11 : f32 to vector<8x128xf32>
    %35 = arith.maximumf %33, %34 : vector<8x128xf32>
    %36 = arith.truncf %35 : vector<8x128xf32> to vector<8x128xbf16>
    %c1 = arith.constant 1 : index
    %c0_12 = arith.constant 0 : index
    %c0_13 = arith.constant 0 : index
    %37 = vector.load %arg2[%c1, %c0_12, %c0_13] : memref<3x128x128xbf16, #tpu.memory_space<vmem>>, vector<1x128x128xbf16>
    %38 = vector.shape_cast %37 : vector<1x128x128xbf16> to vector<128x128xbf16>
    %cst_14 = arith.constant dense<0.000000e+00> : vector<8x128xf32>
    %39 = tpu.matmul %36, %38, %cst_14 {dimension_numbers = #tpu.dot_dimension_numbers<[1], [0], [0], [1], [0, 0, 1, 1], [], []>} : vector<8x128xbf16>, vector<128x128xbf16>, vector<8x128xf32> -> vector<8x128xf32>
    %40 = vector.broadcast %5 : vector<1x128xf32> to vector<8x128xf32>
    %41 = arith.addf %39, %40 : vector<8x128xf32>
    %cst_15 = arith.constant 0.000000e+00 : f32
    %42 = vector.broadcast %cst_15 : f32 to vector<8x128xf32>
    %43 = arith.maximumf %41, %42 : vector<8x128xf32>
    %44 = arith.truncf %43 : vector<8x128xf32> to vector<8x128xbf16>
    %c2 = arith.constant 2 : index
    %c0_16 = arith.constant 0 : index
    %c0_17 = arith.constant 0 : index
    %45 = vector.load %arg2[%c2, %c0_16, %c0_17] : memref<3x128x128xbf16, #tpu.memory_space<vmem>>, vector<1x128x128xbf16>
    %46 = vector.shape_cast %45 : vector<1x128x128xbf16> to vector<128x128xbf16>
    %cst_18 = arith.constant dense<0.000000e+00> : vector<8x128xf32>
    %47 = tpu.matmul %44, %46, %cst_18 {dimension_numbers = #tpu.dot_dimension_numbers<[1], [0], [0], [1], [0, 0, 1, 1], [], []>} : vector<8x128xbf16>, vector<128x128xbf16>, vector<8x128xf32> -> vector<8x128xf32>
    %48 = vector.broadcast %6 : vector<1x128xf32> to vector<8x128xf32>
    %49 = arith.addf %47, %48 : vector<8x128xf32>
    %c0_19 = arith.constant 0 : index
    %c0_20 = arith.constant 0 : index
    %50 = vector.load %arg3[%c0_19, %c0_20] : memref<8x128xf32, #tpu.memory_space<vmem>>, vector<8x128xf32>
    tpu.vector_store %arg3[%c0_19, %c0_20], %49 {strides = array<i32>} : memref<8x128xf32, #tpu.memory_space<vmem>>, vector<8x128xf32>,
    return
  }
}

</mosaic_0001>

<llo_original>
// kernel: modal_classifier_forward.1
$region0: #{modal_classifier_forward.1}
  #allocation0 [shape = 'u32[]', space=smem, size = 0x4, offset = 0x4, fixed_abs, tag = 'smem constant byte address 0x4 - core index']
  #allocation1 [shape = 'u32[144,128]{1,0:T(1,128)}', space=vmem, size = 0x12000, scoped, tag = 'internal scratch']
  %s0 = inlined_call_operand.vmem [shape: f32[8,128], index: 0, kind: input, shape index: {}]
  %s1 = inlined_call_operand.vmem [shape: f32[8,128], index: 1, kind: input, shape index: {}]
  %s2 = inlined_call_operand.hbm [shape: bf16[3,128,128], index: 2, kind: input, shape index: {}]
  %s3 = inlined_call_operand.hbm [shape: f32[8,128], index: 3, kind: output, shape index: {}]
  %s4 = sld [smem:[#allocation0]]
  $region26: #{modal_classifier_forward.1} parent=0
    _
  %s6 = ssub.s32 1, %s4
  %s7 = scalar_select 0, %s6, %s4
  $region1: #{modal_classifier_forward.1} parent=0
    #allocation2 [shape = 'u8[98304]{0}', space=vmem, size = 0x18000, scoped, tag = 'input window, operand 2, single buffered']
    #allocation3 [shape = 's32[1]{0}', space=sflag, size = 0x4, scoped, tag = 'scoped memory for modal_classifier_forward.1']
    #allocation4 [shape = 's32[1]{0}', space=sflag, size = 0x4, scoped, tag = 'scoped memory for modal_classifier_forward.1']
    #allocation5 [shape = 'u8[4096]{0}', space=vmem, size = 0x1000, scoped, tag = 'output window, operand 0, single buffered']
    %8 = vsyncpa [#allocation3], 0
    %9 = vsyncpa [#allocation4], 0
    // Predicated region
    $region2: #{modal_classifier_forward.1} parent=1 // pred_check
      _
    $region3: #{modal_classifier_forward.1} parent=1 // pred_check_branch
      %11 = sbr.rel (0) target = $region5
    $region4: #{modal_classifier_forward.1} parent=1 // pred_region
      _
    $region5: #{modal_classifier_forward.1} parent=1 // pred_fallthru
      _
    // Predicated region
    $region6: #{modal_classifier_forward.1} parent=1 // pred_check
      _
    $region7: #{modal_classifier_forward.1} parent=1 // pred_check_branch
      %13 = sbr.rel (0) target = $region9
    $region8: #{modal_classifier_forward.1} parent=1 // pred_region
      _
    $region9: #{modal_classifier_forward.1} parent=1 // pred_fallthru
      _
    // Predicated region
    $region10: #{modal_classifier_forward.1} parent=1 // pred_check
      _
    $region11: #{modal_classifier_forward.1} parent=1 // pred_check_branch
      %15 = sbr.rel (0) target = $region13
    $region12: #{modal_classifier_forward.1} parent=1 // pred_region
      %s17 = ssub.s32 3072, 3072
      %18 = vsyncadd [#allocation3], %s17
      %s19 = sshll.u32 [#allocation2], 4
      %s20 = int_to_ptr.vmem [resolvable:$true] %s19
      %25 = dma.hbm_to_vmem [thread:$0]  %s2, 3072, %s20, [#allocation3], 64, 64, 4
    $region13: #{modal_classifier_forward.1} parent=1 // pred_fallthru
      _
    // Predicated region
    $region14: #{modal_classifier_forward.1} parent=1 // pred_check
      _
    $region15: #{modal_classifier_forward.1} parent=1 // pred_check_branch
      %27 = sbr.rel (0) target = $region17
    $region16: #{modal_classifier_forward.1} parent=1 // pred_region
      %28 = dma.done [#allocation3], 3072
    $region17: #{modal_classifier_forward.1} parent=1 // pred_fallthru
      _
    %v30 = vld [vmem:[%s0] sm:$0xff]
    %v31 = vld [vmem:[%s1] sm:$0xff]
    %v32 = vrot.slane %v30, 4
    %v33 = vadd.f32 %v30, %v32
    %v34 = vrot.slane %v33, 2
    %v35 = vadd.f32 %v33, %v34
    %v36 = vrot.slane %v35, 1
    %v37 = vadd.f32 %v35, %v36
    %v38 = vrcp.pop 8.0
    %v39 = vmul.f32 %v37, %v38
    %v40 = vsub.f32 %v30, %v39
    %v41 = vmul.f32 %v40, %v40
    %v42 = vrot.slane %v41, 4
    %v43 = vadd.f32 %v41, %v42
    %v44 = vrot.slane %v43, 2
    %v45 = vadd.f32 %v43, %v44
    %v46 = vrot.slane %v45, 1
    %v47 = vadd.f32 %v45, %v46
    %v48 = vmul.f32 %v47, %v38
    %v49 = vadd.f32 %v48, 1e-05
    %v50 = vrsqrt.pop %v49
    %v51 = vmul.f32 %v31, %v50
    %v52 = vmul.f32 %v39, %v51
    %v54 = vrot.slane %v52, 7
    %v56 = vsub.f32 %v31, %v54
    %v57 = vlaneseq
    %v58 = vshrl.u32 %v57, 7
    %v59 = vsub.s32 0, %v58
    %v60 = vrot.slane %v51, %v59
    %v61 = vmul.f32 %v30, %v60
    %v62 = vlaneseq
    %v63 = vshrl.u32 %v62, 7
    %v64 = vsub.s32 1, %v63
    %v65 = vrot.slane %v56, %v64
    %v66 = vadd.f32 %v61, %v65
    %v67 = vpack.c.bf16 %v66, %v66
    %v68 = vld [vmem:[#allocation2] sm:$0xf]
    %v69 = vld [vmem:[#allocation2 + $0x4] sm:$0xf]
    %v70 = vld [vmem:[#allocation2 + $0x8] sm:$0xf]
    %v71 = vld [vmem:[#allocation2 + $0xc] sm:$0xf]
    %v72 = vld [vmem:[#allocation2 + $0x10] sm:$0xf]
    %v73 = vld [vmem:[#allocation2 + $0x14] sm:$0xf]
    %v74 = vld [vmem:[#allocation2 + $0x18] sm:$0xf]
    %v75 = vld [vmem:[#allocation2 + $0x1c] sm:$0xf]
    %v76 = vld [vmem:[#allocation2 + $0x20] sm:$0xf]
    %v77 = vld [vmem:[#allocation2 + $0x24] sm:$0xf]
    %v78 = vld [vmem:[#allocation2 + $0x28] sm:$0xf]
    %v79 = vld [vmem:[#allocation2 + $0x2c] sm:$0xf]
    %v80 = vld [vmem:[#allocation2 + $0x30] sm:$0xf]
    %v81 = vld [vmem:[#allocation2 + $0x34] sm:$0xf]
    %v82 = vld [vmem:[#allocation2 + $0x38] sm:$0xf]
    %v83 = vld [vmem:[#allocation2 + $0x3c] sm:$0xf]
    %v84 = vlaneseq
    %v85 = vshrl.u32 %v84, 7
    %v86 = vsub.s32 2, %v85
    %v87 = vrot.slane %v31, %v86
    %v104 = vunpack.c.l.b16 %v68
    %v105 = vunpack.c.l.b16 %v69
    %v106 = vunpack.c.l.b16 %v70
    %v107 = vunpack.c.l.b16 %v71
    %v108 = vunpack.c.l.b16 %v72
    %v109 = vunpack.c.l.b16 %v73
    %v110 = vunpack.c.l.b16 %v74
    %v111 = vunpack.c.l.b16 %v75
    %v112 = vunpack.c.l.b16 %v76
    %v113 = vunpack.c.l.b16 %v77
    %v114 = vunpack.c.l.b16 %v78
    %v115 = vunpack.c.l.b16 %v79
    %v116 = vunpack.c.l.b16 %v80
    %v117 = vunpack.c.l.b16 %v81
    %v118 = vunpack.c.l.b16 %v82
    %v119 = vunpack.c.l.b16 %v83
    %v120 = vpack.c.b16 %v105, %v104
    %v121 = vpack.c.b16 %v107, %v106
    %v122 = vpack.c.b16 %v109, %v108
    %v123 = vpack.c.b16 %v111, %v110
    %v124 = vpack.c.b16 %v113, %v112
    %v125 = vpack.c.b16 %v115, %v114
    %v126 = vpack.c.b16 %v117, %v116
    %v127 = vpack.c.b16 %v119, %v118
    %136 = vmatprep.subr.bf16.mxu0 0
    %137 = vmatpush1.bf16.msra.mxu0 %v120
    %138 = vmatprep.subr.bf16.mxu0 0
    %139 = vmatpush1.bf16.msra.mxu0 %v121
    %140 = vmatprep.subr.bf16.mxu0 0
    %141 = vmatpush1.bf16.msra.mxu0 %v122
    %142 = vmatprep.subr.bf16.mxu0 0
    %143 = vmatpush1.bf16.msra.mxu0 %v123
    %144 = vmatprep.subr.bf16.mxu0 0
    %145 = vmatpush1.bf16.msra.mxu0 %v124
    %146 = vmatprep.subr.bf16.mxu0 0
    %147 = vmatpush1.bf16.msra.mxu0 %v125
    %148 = vmatprep.subr.bf16.mxu0 0
    %149 = vmatpush1.bf16.msra.mxu0 %v126
    %150 = vmatprep.subr.bf16.mxu0 0
    %151 = vmatpush1.bf16.msra.mxu0 %v127
    %152 = vmatprep.subr.bf16.mxu0 0
    %153 = vmatpush1.bf16.msra.mxu0 0
    %154 = vmatprep.subr.bf16.mxu0 0
    %155 = vmatpush1.bf16.msra.mxu0 0
    %156 = vmatprep.subr.bf16.mxu0 0
    %157 = vmatpush1.bf16.msra.mxu0 0
    %158 = vmatprep.subr.bf16.mxu0 0
    %159 = vmatpush1.bf16.msra.mxu0 0
    %160 = vmatprep.subr.bf16.mxu0 0
    %161 = vmatpush1.bf16.msra.mxu0 0
    %162 = vmatprep.subr.bf16.mxu0 0
    %163 = vmatpush1.bf16.msra.mxu0 0
    %164 = vmatprep.subr.bf16.mxu0 0
    %165 = vmatpush1.bf16.msra.mxu0 0
    %166 = vmatprep.subr.bf16.mxu0 0
    %167 = vmatpush1.bf16.msra.mxu0 0
    %168 = vmatprep.mubr.bf16.mxu0 0
    %169 = vmatmul.mubr.bf16.gmra.mrb[0].mxu0 %v67
    %v170 = vpop.f32.mrb[0].mxu0
    %v171 = vadd.f32 %v87, %v170
    %v172 = vpop.f32.mrb[0].mxu0
    %v173 = vpop.f32.mrb[0].mxu0
    %v174 = vpop.f32.mrb[0].mxu0
    %175 = vdwg.mxu0
    %v176 = vmax.f32 %v171, 0.0
    %v177 = vpack.c.bf16 %v176, %v176
    %s178 = scalar_lea.vmem [#allocation2], 64
    %v179 = vld [vmem:[%s178] sm:$0xf]
    %v180 = vld [vmem:[%s178 + $0x4] sm:$0xf]
    %v181 = vld [vmem:[%s178 + $0x8] sm:$0xf]
    %v182 = vld [vmem:[%s178 + $0xc] sm:$0xf]
    %v183 = vld [vmem:[%s178 + $0x10] sm:$0xf]
    %v184 = vld [vmem:[%s178 + $0x14] sm:$0xf]
    %v185 = vld [vmem:[%s178 + $0x18] sm:$0xf]
    %v186 = vld [vmem:[%s178 + $0x1c] sm:$0xf]
    %v187 = vld [vmem:[%s178 + $0x20] sm:$0xf]
    %v188 = vld [vmem:[%s178 + $0x24] sm:$0xf]
    %v189 = vld [vmem:[%s178 + $0x28] sm:$0xf]
    %v190 = vld [vmem:[%s178 + $0x2c] sm:$0xf]
    %v191 = vld [vmem:[%s178 + $0x30] sm:$0xf]
    %v192 = vld [vmem:[%s178 + $0x34] sm:$0xf]
    %v193 = vld [vmem:[%s178 + $0x38] sm:$0xf]
    %v194 = vld [vmem:[%s178 + $0x3c] sm:$0xf]
    %v195 = vlaneseq
    %v196 = vshrl.u32 %v195, 7
    %v197 = vsub.s32 3, %v196
    %v198 = vrot.slane %v31, %v197
    %v215 = vunpack.c.l.b16 %v179
    %v216 = vunpack.c.l.b16 %v180
    %v217 = vunpack.c.l.b16 %v181
    %v218 = vunpack.c.l.b16 %v182
    %v219 = vunpack.c.l.b16 %v183
    %v220 = vunpack.c.l.b16 %v184
    %v221 = vunpack.c.l.b16 %v185
    %v222 = vunpack.c.l.b16 %v186
    %v223 = vunpack.c.l.b16 %v187
    %v224 = vunpack.c.l.b16 %v188
    %v225 = vunpack.c.l.b16 %v189
    %v226 = vunpack.c.l.b16 %v190
    %v227 = vunpack.c.l.b16 %v191
    %v228 = vunpack.c.l.b16 %v192
    %v229 = vunpack.c.l.b16 %v193
    %v230 = vunpack.c.l.b16 %v194
    %v231 = vpack.c.b16 %v216, %v215
    %v232 = vpack.c.b16 %v218, %v217
    %v233 = vpack.c.b16 %v220, %v219
    %v234 = vpack.c.b16 %v222, %v221
    %v235 = vpack.c.b16 %v224, %v223
    %v236 = vpack.c.b16 %v226, %v225
    %v237 = vpack.c.b16 %v228, %v227
    %v238 = vpack.c.b16 %v230, %v229
    %247 = vmatprep.subr.bf16.mxu0 0
    %248 = vmatpush1.bf16.msra.mxu0 %v231
    %249 = vmatprep.subr.bf16.mxu0 0
    %250 = vmatpush1.bf16.msra.mxu0 %v232
    %251 = vmatprep.subr.bf16.mxu0 0
    %252 = vmatpush1.bf16.msra.mxu0 %v233
    %253 = vmatprep.subr.bf16.mxu0 0
    %254 = vmatpush1.bf16.msra.mxu0 %v234
    %255 = vmatprep.subr.bf16.mxu0 0
    %256 = vmatpush1.bf16.msra.mxu0 %v235
    %257 = vmatprep.subr.bf16.mxu0 0
    %258 = vmatpush1.bf16.msra.mxu0 %v236
    %259 = vmatprep.subr.bf16.mxu0 0
    %260 = vmatpush1.bf16.msra.mxu0 %v237
    %261 = vmatprep.subr.bf16.mxu0 0
    %262 = vmatpush1.bf16.msra.mxu0 %v238
    %263 = vmatprep.subr.bf16.mxu0 0
    %264 = vmatpush1.bf16.msra.mxu0 0
    %265 = vmatprep.subr.bf16.mxu0 0
    %266 = vmatpush1.bf16.msra.mxu0 0
    %267 = vmatprep.subr.bf16.mxu0 0
    %268 = vmatpush1.bf16.msra.mxu0 0
    %269 = vmatprep.subr.bf16.mxu0 0
    %270 = vmatpush1.bf16.msra.mxu0 0
    %271 = vmatprep.subr.bf16.mxu0 0
    %272 = vmatpush1.bf16.msra.mxu0 0
    %273 = vmatprep.subr.bf16.mxu0 0
    %274 = vmatpush1.bf16.msra.mxu0 0
    %275 = vmatprep.subr.bf16.mxu0 0
    %276 = vmatpush1.bf16.msra.mxu0 0
    %277 = vmatprep.subr.bf16.mxu0 0
    %278 = vmatpush1.bf16.msra.mxu0 0
    %279 = vmatprep.mubr.bf16.mxu0 0
    %280 = vmatmul.mubr.bf16.gmra.mrb[0].mxu0 %v177
    %v281 = vpop.f32.mrb[0].mxu0
    %v282 = vadd.f32 %v198, %v281
    %v283 = vpop.f32.mrb[0].mxu0
    %v284 = vpop.f32.mrb[0].mxu0
    %v285 = vpop.f32.mrb[0].mxu0
    %286 = vdwg.mxu0
    %v287 = vmax.f32 %v282, 0.0
    %v288 = vpack.c.bf16 %v287, %v287
    %s289 = scalar_lea.vmem [#allocation2], 128
    %v290 = vld [vmem:[%s289] sm:$0xf]
    %v291 = vld [vmem:[%s289 + $0x4] sm:$0xf]
    %v292 = vld [vmem:[%s289 + $0x8] sm:$0xf]
    %v293 = vld [vmem:[%s289 + $0xc] sm:$0xf]
    %v294 = vld [vmem:[%s289 + $0x10] sm:$0xf]
    %v295 = vld [vmem:[%s289 + $0x14] sm:$0xf]
    %v296 = vld [vmem:[%s289 + $0x18] sm:$0xf]
    %v297 = vld [vmem:[%s289 + $0x1c] sm:$0xf]
    %v298 = vld [vmem:[%s289 + $0x20] sm:$0xf]
    %v299 = vld [vmem:[%s289 + $0x24] sm:$0xf]
    %v300 = vld [vmem:[%s289 + $0x28] sm:$0xf]
    %v301 = vld [vmem:[%s289 + $0x2c] sm:$0xf]
    %v302 = vld [vmem:[%s289 + $0x30] sm:$0xf]
    %v303 = vld [vmem:[%s289 + $0x34] sm:$0xf]
    %v304 = vld [vmem:[%s289 + $0x38] sm:$0xf]
    %v305 = vld [vmem:[%s289 + $0x3c] sm:$0xf]
    %v306 = vlaneseq
    %v307 = vshrl.u32 %v306, 7
    %v308 = vsub.s32 4, %v307
    %v309 = vrot.slane %v31, %v308
    %v326 = vunpack.c.l.b16 %v290
    %v327 = vunpack.c.l.b16 %v291
    %v328 = vunpack.c.l.b16 %v292
    %v329 = vunpack.c.l.b16 %v293
    %v330 = vunpack.c.l.b16 %v294
    %v331 = vunpack.c.l.b16 %v295
    %v332 = vunpack.c.l.b16 %v296
    %v333 = vunpack.c.l.b16 %v297
    %v334 = vunpack.c.l.b16 %v298
    %v335 = vunpack.c.l.b16 %v299
    %v336 = vunpack.c.l.b16 %v300
    %v337 = vunpack.c.l.b16 %v301
    %v338 = vunpack.c.l.b16 %v302
    %v339 = vunpack.c.l.b16 %v303
    %v340 = vunpack.c.l.b16 %v304
    %v341 = vunpack.c.l.b16 %v305
    %v342 = vpack.c.b16 %v327, %v326
    %v343 = vpack.c.b16 %v329, %v328
    %v344 = vpack.c.b16 %v331, %v330
    %v345 = vpack.c.b16 %v333, %v332
    %v346 = vpack.c.b16 %v335, %v334
    %v347 = vpack.c.b16 %v337, %v336
    %v348 = vpack.c.b16 %v339, %v338
    %v349 = vpack.c.b16 %v341, %v340
    %358 = vmatprep.subr.bf16.mxu0 0
    %359 = vmatpush1.bf16.msra.mxu0 %v342
    %360 = vmatprep.subr.bf16.mxu0 0
    %361 = vmatpush1.bf16.msra.mxu0 %v343
    %362 = vmatprep.subr.bf16.mxu0 0
    %363 = vmatpush1.bf16.msra.mxu0 %v344
    %364 = vmatprep.subr.bf16.mxu0 0
    %365 = vmatpush1.bf16.msra.mxu0 %v345
    %366 = vmatprep.subr.bf16.mxu0 0
    %367 = vmatpush1.bf16.msra.mxu0 %v346
    %368 = vmatprep.subr.bf16.mxu0 0
    %369 = vmatpush1.bf16.msra.mxu0 %v347
    %370 = vmatprep.subr.bf16.mxu0 0
    %371 = vmatpush1.bf16.msra.mxu0 %v348
    %372 = vmatprep.subr.bf16.mxu0 0
    %373 = vmatpush1.bf16.msra.mxu0 %v349
    %374 = vmatprep.subr.bf16.mxu0 0
    %375 = vmatpush1.bf16.msra.mxu0 0
    %376 = vmatprep.subr.bf16.mxu0 0
    %377 = vmatpush1.bf16.msra.mxu0 0
    %378 = vmatprep.subr.bf16.mxu0 0
    %379 = vmatpush1.bf16.msra.mxu0 0
    %380 = vmatprep.subr.bf16.mxu0 0
    %381 = vmatpush1.bf16.msra.mxu0 0
    %382 = vmatprep.subr.bf16.mxu0 0
    %383 = vmatpush1.bf16.msra.mxu0 0
    %384 = vmatprep.subr.bf16.mxu0 0
    %385 = vmatpush1.bf16.msra.mxu0 0
    %386 = vmatprep.subr.bf16.mxu0 0
    %387 = vmatpush1.bf16.msra.mxu0 0
    %388 = vmatprep.subr.bf16.mxu0 0
    %389 = vmatpush1.bf16.msra.mxu0 0
    %390 = vmatprep.mubr.bf16.mxu0 0
    %391 = vmatmul.mubr.bf16.gmra.mrb[0].mxu0 %v288
    %v392 = vpop.f32.mrb[0].mxu0
    %v393 = vadd.f32 %v309, %v392
    %v394 = vpop.f32.mrb[0].mxu0
    %v395 = vpop.f32.mrb[0].mxu0
    %v396 = vpop.f32.mrb[0].mxu0
    %397 = vdwg.mxu0
    %398 = vst [vmem:[#allocation5] sm:$0xff] %v393
    // Predicated region
    $region18: #{modal_classifier_forward.1} parent=1 // pred_check
      _
    $region19: #{modal_classifier_forward.1} parent=1 // pred_check_branch
      %400 = sbr.rel (0) target = $region21
    $region20: #{modal_classifier_forward.1} parent=1 // pred_region
      %s402 = ssub.s32 128, 128
      %403 = vsyncadd [#allocation4], %s402
      %s405 = sshll.u32 [#allocation5], 4
      %s406 = int_to_ptr.vmem [resolvable:$true] %s405
      %408 = dma.vmem_to_hbm [thread:$0]  %s406, 128, %s3, [#allocation4]
    $region21: #{modal_classifier_forward.1} parent=1 // pred_fallthru
      _
    // Predicated region
    $region22: #{modal_classifier_forward.1} parent=1 // pred_check
      _
    $region23: #{modal_classifier_forward.1} parent=1 // pred_check_branch
      %410 = sbr.rel (0) target = $region25
    $region24: #{modal_classifier_forward.1} parent=1 // pred_region
      %411 = dma.done [#allocation4], 128
    $region25: #{modal_classifier_forward.1} parent=1 // pred_fallthru
      _
    %412 = vsyncpa [#allocation3], 1
    %413 = vsyncpa [#allocation4], 1

</llo_original>
